<compile_context>
chip_gen: v6e
topology: v6e:2x2x1
jax: 0.10.0
libtpu: 0.0.40
codegen_flags: <defaults>
</compile_context>

<pallas_src>
import functools
import math

import jax
import jax.numpy as jnp
from jax.experimental import pallas as pl
from jax.experimental.pallas import tpu as pltpu


def _patch_copy_kernel(x_ref, o_ref, *, patch_size: int, num_chunks: int, lane_width: int):
    # x_ref: (1, ts, d)   o_ref: (1, D, ts*p//L, L)   with D = d // patch_size.
    # Per chunk i:  o[0, i].reshape(ts, p) == x[0, :, i*p:(i+1)*p]  -- pure copy, no FLOPs.
    ts = x_ref.shape[1]
    p = patch_size
    rows = (ts * p) // lane_width
    # TODO(synk): for very large D (= d/p, e.g. d=1024, p=4) switch this unrolled loop to a
    # lax.fori_loop over 128-lane groups to bound program size; typical audio D is small.
    for i in range(num_chunks):
        chunk = x_ref[0, :, i * p:(i + 1) * p]           # (ts, p) static lane slice
        o_ref[0, i] = chunk.reshape(rows, lane_width)     # sublane->lane relayout, lane-dense store


def _round_up(a: int, m: int) -> int:
    return (a + m - 1) // m * m


def _lcm(*xs: int) -> int:
    out = 1
    for x in xs:
        out = out * x // math.gcd(out, x)
    return out


def _sublane_multiple(itemsize: int) -> int:
    # (8,128) f32 tile; packed dtypes use 16/32 sublanes per tile.
    return max(8, 32 // itemsize)


def _tile_vmem_bytes(ts: int, d: int, p: int, L: int, itemsize: int) -> int:
    # Double-buffered input + output blocks, with Mosaic sublane/lane tile padding.
    sub = _sublane_multiple(itemsize)
    num_chunks = d // p
    rows = (ts * p) // L
    in_b = _round_up(ts, sub) * _round_up(d, 128) * itemsize
    out_b = num_chunks * _round_up(rows, sub) * _round_up(L, 128) * itemsize
    return 2 * (in_b + out_b)


def _vmem_plan() -> tuple[int, int]:
    """(vmem_limit_bytes, tile-picker budget) derived from the actual chip generation."""
    cap = 64 * 1024 * 1024
    try:
        info = pltpu.get_tpu_info()
        cap = int(getattr(info, "vmem_capacity_bytes", cap) or cap)
    except Exception:
        pass
    limit = min(cap * 3 // 4, 96 * 1024 * 1024)   # ~48 MiB on v7x (64 MiB), 96 MiB on v5e/v6e (128 MiB)
    budget = limit * 4 // 5                        # ~20% headroom for Mosaic scratch
    return limit, budget


def _pick_seq_tile(b: int, s: int, d: int, p: int, L: int, itemsize: int,
                   budget: int, *, min_steps: int = 8) -> int:
    sub = _sublane_multiple(itemsize)
    # ts must (a) divide s, (b) keep ts*p an exact multiple of L (per-chunk block reshape),
    # (c) keep input rows (ts) and output rows (ts*p/L) sublane-aligned for unmasked tiles.
    align = _lcm(sub, L // math.gcd(p, L), (sub * L) // math.gcd(p, sub * L))
    cands = [t for t in range(align, s, align) if s % t == 0]
    if not cands:
        return s                                   # full sequence per step (always a legal block)
    fitting = [t for t in cands if _tile_vmem_bytes(t, d, p, L, itemsize) <= budget]
    if not fitting:
        return cands[0]                            # smallest aligned tile; caller bumps vmem limit
    # Biggest tile that still leaves >= min_steps grid steps (pipeline overlap + >=2 per TC
    # on v7x) and keeps each chunk's contiguous HBM writeback run >= 1 KiB.
    good = [t for t in fitting if b * (s // t) >= min_steps and t * p * itemsize >= 1024]
    return max(good) if good else max(fitting)


def audio_patcher(x: jnp.ndarray, patch_size: int, *, seq_tile: int | None = None) -> jnp.ndarray:
    """Pallas implementation of AudioPatcher.forward.

    x: (b, s, d)  ->  (b, s // patch_size, d * patch_size)
    """
    b, s, d = x.shape
    p = patch_size
    if p <= 0 or d % p != 0:
        raise ValueError("num_features must be divisible by patch_size (torch unfold)")
    if s % p != 0:
        raise ValueError("sequence length must be divisible by patch_size (torch reshape)")
    num_chunks = d // p                      # D = feature patches per timestep
    num_patches = s // p
    itemsize = jnp.dtype(x.dtype).itemsize

    # Lane-dense output layout when possible: (b, D, s*p//L, L) has identical row-major
    # bytes to (b, D, s, p), so the final reshape below stays metadata-only.
    L = 128 if (s * p) % 128 == 0 else p
    s_rows = (s * p) // L

    vmem_limit, budget = _vmem_plan()
    if seq_tile is None:
        ts = _pick_seq_tile(b, s, d, p, L, itemsize, budget)
    else:
        ts = seq_tile
        if s % ts != 0 or (ts * p) % L != 0:
            raise ValueError("seq_tile must divide s and keep ts*patch_size a multiple of the lane width")
    rows = (ts * p) // L
    tile_bytes = _tile_vmem_bytes(ts, d, p, L, itemsize)
    vmem_limit = max(vmem_limit, tile_bytes * 5 // 4)   # graceful degrade instead of VMEM OOM

    kernel = functools.partial(_patch_copy_kernel, patch_size=p,
                               num_chunks=num_chunks, lane_width=L)

    out4 = pl.pallas_call(
        kernel,
        out_shape=jax.ShapeDtypeStruct((b, num_chunks, s_rows, L), x.dtype),
        grid_spec=pltpu.PrefetchScalarGridSpec(
            num_scalar_prefetch=0,
            grid=(b, s // ts),
            in_specs=[
                pl.BlockSpec((1, ts, d), lambda bb, tt: (bb, tt, 0)),
            ],
            out_specs=pl.BlockSpec((1, num_chunks, rows, L), lambda bb, tt: (bb, 0, tt, 0)),
        ),
        compiler_params=pltpu.CompilerParams(
            dimension_semantics=("parallel", "parallel"),
            vmem_limit_bytes=int(vmem_limit),
        ),
    )(x)

    # Contiguous (metadata-only) regroup: (b, D, s*p//L, L) == (b, D, s, p) bytes -> (b, s//p, d*p).
    return out4.reshape(b, num_patches, d * p)


def _reference(x: jnp.ndarray, p: int) -> jnp.ndarray:
    # Exact PyTorch forward: x.unfold(2, p, p).permute(0, 2, 1, 3).reshape(b, s//p, -1)
    b, s, d = x.shape
    return (x.reshape(b, s, d // p, p)
             .transpose(0, 2, 1, 3)
             .reshape(b, s // p, d * p))


if __name__ == "__main__":
    key = jax.random.PRNGKey(0)
    k1, k2, k3 = jax.random.split(key, 3)

    # 1) Tiny shape (s*p < 128 -> fallback lane width == patch_size, masked-store path).
    b, s, d, p = 2, 16, 8, 4
    x = jax.random.normal(k1, (b, s, d), dtype=jnp.float32)
    out = jax.block_until_ready(audio_patcher(x, p))
    ref = _reference(x, p)
    assert out.shape == (b, s // p, d * p), out.shape
    assert out.dtype == x.dtype
    assert jnp.array_equal(out, ref), "mismatch vs reference (fallback layout path)"

    # 2) Lane-dense layout + multi-step grid (f32): exercises the sublane->lane relayout
    #    and the seq-tile picker (expects ts=256 -> grid (2, 4)).
    b2, s2, d2, p2 = 2, 1024, 32, 4
    x2 = jax.random.normal(k2, (b2, s2, d2), dtype=jnp.float32)
    out2 = jax.block_until_ready(audio_patcher(x2, p2))
    assert jnp.array_equal(out2, _reference(x2, p2)), "mismatch vs reference (lane-dense f32)"

    # 3) bf16 input: dtype-aware sublane alignment (16-row tiles) on the lane-dense path.
    b3, s3, d3, p3 = 1, 2048, 64, 8
    x3 = jax.random.normal(k3, (b3, s3, d3), dtype=jnp.bfloat16)
    out3 = jax.block_until_ready(audio_patcher(x3, p3))
    assert jnp.array_equal(out3, _reference(x3, p3)), "mismatch vs reference (lane-dense bf16)"

    print("KERNEL_OK")
</pallas_src>

<mosaic_0001>
module attributes {stable_mosaic.version = 11 : i64} {
  func.func @_patch_copy_kernel(%arg0: i32, %arg1: i32, %arg2: memref<1x8x8xf32, #tpu.memory_space<vmem>>, %arg3: memref<1x2x8x4xf32, #tpu.memory_space<vmem>>) attributes {dimension_semantics = [#tpu.dimension_semantics<parallel>, #tpu.dimension_semantics<parallel>], iteration_bounds = array<i64: 2, 2>, scalar_prefetch = 0 : i64, scratch_operands = 0 : i64, tpu.core_type = #tpu.core_type<tc>, window_params = [{transform_indices = @transform_0, window_bounds = array<i64: 1, 8, 8>}, {transform_indices = @transform_1, window_bounds = array<i64: 1, 2, 8, 4>}]} {
    %c0 = arith.constant 0 : index
    %c0_0 = arith.constant 0 : index
    %c0_1 = arith.constant 0 : index
    %0 = vector.load %arg2[%c0, %c0_0, %c0_1] : memref<1x8x8xf32, #tpu.memory_space<vmem>>, vector<1x8x4xf32>
    %1 = vector.shape_cast %0 : vector<1x8x4xf32> to vector<8x4xf32>
    %c0_2 = arith.constant 0 : index
    %c0_3 = arith.constant 0 : index
    %c0_4 = arith.constant 0 : index
    %c0_5 = arith.constant 0 : index
    %2 = vector.load %arg3[%c0_2, %c0_3, %c0_4, %c0_5] : memref<1x2x8x4xf32, #tpu.memory_space<vmem>>, vector<1x1x8x4xf32>
    %3 = vector.shape_cast %2 : vector<1x1x8x4xf32> to vector<8x4xf32>
    %4 = vector.shape_cast %1 : vector<8x4xf32> to vector<1x1x8x4xf32>
    tpu.vector_store %arg3[%c0_2, %c0_3, %c0_4, %c0_5], %4 {strides = array<i32>} : memref<1x2x8x4xf32, #tpu.memory_space<vmem>>, vector<1x1x8x4xf32>,
    %c0_6 = arith.constant 0 : index
    %c0_7 = arith.constant 0 : index
    %c4 = arith.constant 4 : index
    %5 = vector.load %arg2[%c0_6, %c0_7, %c4] : memref<1x8x8xf32, #tpu.memory_space<vmem>>, vector<1x8x4xf32>
    %6 = vector.shape_cast %5 : vector<1x8x4xf32> to vector<8x4xf32>
    %c0_8 = arith.constant 0 : index
    %c1 = arith.constant 1 : index
    %c0_9 = arith.constant 0 : index
    %c0_10 = arith.constant 0 : index
    %7 = vector.load %arg3[%c0_8, %c1, %c0_9, %c0_10] : memref<1x2x8x4xf32, #tpu.memory_space<vmem>>, vector<1x1x8x4xf32>
    %8 = vector.shape_cast %7 : vector<1x1x8x4xf32> to vector<8x4xf32>
    %9 = vector.shape_cast %6 : vector<8x4xf32> to vector<1x1x8x4xf32>
    tpu.vector_store %arg3[%c0_8, %c1, %c0_9, %c0_10], %9 {strides = array<i32>} : memref<1x2x8x4xf32, #tpu.memory_space<vmem>>, vector<1x1x8x4xf32>,
    return
  }
  func.func @transform_0(%arg0: i32, %arg1: i32) -> (i32, i32, i32) {
    %c0_i32 = arith.constant 0 : i32
    %c0_i32_0 = arith.constant 0 : i32
    return %arg0, %arg1, %c0_i32 : i32, i32, i32
  }
  func.func @transform_1(%arg0: i32, %arg1: i32) -> (i32, i32, i32, i32) {
    %c0_i32 = arith.constant 0 : i32
    %c0_i32_0 = arith.constant 0 : i32
    %c0_i32_1 = arith.constant 0 : i32
    return %arg0, %c0_i32, %arg1, %c0_i32_0 : i32, i32, i32, i32
  }
}

</mosaic_0001>

<llo_original>
// kernel: tpu_custom_call.1
$region0: #{tpu_custom_call.1}
  #allocation0 [shape = 'u32[]', space=smem, size = 0x4, offset = 0x4, fixed_abs, tag = 'smem constant byte address 0x4 - core index']
  #allocation1 [shape = 'u32[144,128]{1,0:T(1,128)}', space=vmem, size = 0x12000, scoped, tag = 'internal scratch']
  %s0 = inlined_call_operand.vmem [shape: f32[2,16,8], index: 0, kind: input, shape index: {}]
  %s1 = inlined_call_operand.vmem [shape: f32[2,2,16,4], index: 1, kind: output, shape index: {}]
  %s2 = sld [smem:[#allocation0]]
  $region71: #{tpu_custom_call.1} parent=0
    _
  %s4 = ssub.s32 1, %s2
  %s5 = scalar_select 0, %s4, %s2
  $region1: #{tpu_custom_call.1} parent=0
    #allocation2 [shape = 'u8[16384]{0}', space=vmem, size = 0x4000, scoped, tag = 'output window, operand 0']
    loop: start=0, step=1, limit=6
    $region2: #{tpu_custom_call.1} parent=1 // loop_pre_header
      _
    $region3: #{tpu_custom_call.1} parent=1 // loop_header
      %s7 = sphi 0, %s11
      %p8 = scmp.ge.s32.totalorder %s7, 6
      %s14 = sphi 0, %s26
      %s15 = sphi 0, %s22
      %s16 = sphi 0, %s14
      %s17 = sphi 0, %s15
      %s18 = sphi 0, %s16
      %s19 = sphi 0, %s17
      %s31 = sphi 0, %s33
      %s34 = sphi 0, %s31
      %s35 = sphi 0, %s34
      %s51 = sphi 0, %s35
      %s59 = sphi 0, %s61
      %s62 = sphi 0, %s59
      %s63 = sphi 0, %s62
      %s79 = sphi 0, %s63
    $region4: #{tpu_custom_call.1} parent=1 // loop_header_branch
      %10 = sbr.rel (%p8) target = $region8
    $region5: #{tpu_custom_call.1} parent=1 // loop_body
      %s12 = ssub.s32 %s7, 1
      %s13 = ssub.s32 %s7, 2
      %s20 = sadd.s32 1, %s15
      %p21 = scmp.ge.s32.totalorder %s20, 2
      %s22 = scalar_select %p21, 0, %s20
      %s23 = sadd.s32 1, %s14
      %s24 = scalar_select %p21, %s23, %s14
      %p25 = scmp.ge.s32.totalorder %s24, 2
      %s26 = scalar_select %p25, 0, %s24
      %s27 = ssub.s32 %s14, %s26
      %s28 = ssub.s32 %s15, %s22
      %s29 = sor.u32 %s27, %s28
      %p30 = scmp.eq.s32.totalorder %s29, 0
      %s32 = sadd.s32 %s31, 1
      %s33 = scalar_select %p30, %s31, %s32
      %p36 = pneg %p30
      %p37 = scmp.eq.s32.totalorder %s7, 3
      %p38 = por %p36, %p37
      %p39 = scmp.ne.s32.totalorder %s31, %s34
      %p40 = scmp.eq.s32.totalorder %s7, 0
      %p41 = por %p39, %p40
      %p42 = scmp.ne.s32.totalorder %s31, %s34
      %p43 = scmp.eq.s32.totalorder %s12, 3
      %p44 = por %p42, %p43
      %p45 = scmp.ne.s32.totalorder %s34, %s35
      %p46 = scmp.eq.s32.totalorder %s12, 0
      %p47 = por %p45, %p46
      %p48 = scmp.ne.s32.totalorder %s34, %s35
      %p49 = scmp.eq.s32.totalorder %s13, 3
      %p50 = por %p48, %p49
      %p52 = scmp.ne.s32.totalorder %s35, %s51
      %p53 = scmp.eq.s32.totalorder %s13, 0
      %p54 = por %p52, %p53
      %s55 = ssub.s32 %s14, %s26
      %s56 = ssub.s32 %s15, %s22
      %s57 = sor.u32 %s55, %s56
      %p58 = scmp.eq.s32.totalorder %s57, 0
      %s60 = sadd.s32 %s59, 1
      %s61 = scalar_select %p58, %s59, %s60
      %p64 = pneg %p58
      %p65 = scmp.eq.s32.totalorder %s7, 3
      %p66 = por %p64, %p65
      %p67 = scmp.ne.s32.totalorder %s59, %s62
      %p68 = scmp.eq.s32.totalorder %s7, 0
      %p69 = por %p67, %p68
      %p70 = scmp.ne.s32.totalorder %s59, %s62
      %p71 = scmp.eq.s32.totalorder %s12, 3
      %p72 = por %p70, %p71
      %p73 = scmp.ne.s32.totalorder %s62, %s63
      %p74 = scmp.eq.s32.totalorder %s12, 0
      %p75 = por %p73, %p74
      %p76 = scmp.ne.s32.totalorder %s62, %s63
      %p77 = scmp.eq.s32.totalorder %s13, 3
      %p78 = por %p76, %p77
      %p80 = scmp.ne.s32.totalorder %s63, %s79
      %p81 = scmp.eq.s32.totalorder %s13, 0
      %p82 = por %p80, %p81
      %p83 = scmp.le.s32.totalorder 1, %s7
      %p84 = scmp.lt.s32.totalorder %s7, 5
      %p85 = pnand %p83, %p84
      %p86 = pneg %p85
      // Predicated region
      $region9: #{tpu_custom_call.1} parent=5 // pred_check
        _
      $region10: #{tpu_custom_call.1} parent=5 // pred_check_branch
        %88 = sbr.rel (%p85) target = $region12
      $region11: #{tpu_custom_call.1} parent=5 // pred_region
        %s89 = ssub.s32 %s7, 1
      $region12: #{tpu_custom_call.1} parent=5 // pred_fallthru
        _
      %p90 = scmp.lt.s32.totalorder %s7, 4
      // Predicated region
      $region13: #{tpu_custom_call.1} parent=5 // pred_check
        %p91 = pneg %p90
      $region14: #{tpu_custom_call.1} parent=5 // pred_check_branch
        %93 = sbr.rel (%p91) target = $region16
      $region15: #{tpu_custom_call.1} parent=5 // pred_region
        // Predicated region
        $region17: #{tpu_custom_call.1} parent=15 // pred_check
          %p94 = pneg %p41
        $region18: #{tpu_custom_call.1} parent=15 // pred_check_branch
          %96 = sbr.rel (%p94) target = $region20
        $region19: #{tpu_custom_call.1} parent=15 // pred_region
          %p97 = scmp.lt.s32.totalorder %s14, 1
          %s98 = scalar_select %p97, %s14, 1
          %p99 = scmp.lt.s32.totalorder %s15, 1
          %s100 = scalar_select %p99, %s15, 1
          %s101 = smul.addr %s98, 2
          %s102 = sadd.s32 %s100, %s101
          %s103 = smul.addr %s102, 8
          %s104 = scalar_lea.vmem %s0, %s103
        $region20: #{tpu_custom_call.1} parent=15 // pred_fallthru
          _
      $region16: #{tpu_custom_call.1} parent=5 // pred_fallthru
        _
      %p105 = scmp.le.s32.totalorder 1, %s7
      %p106 = scmp.lt.s32.totalorder %s7, 5
      %p107 = pnand %p105, %p106
      %p108 = pneg %p107
      // Predicated region
      $region21: #{tpu_custom_call.1} parent=5 // pred_check
        _
      $region22: #{tpu_custom_call.1} parent=5 // pred_check_branch
        %110 = sbr.rel (%p107) target = $region24
      $region23: #{tpu_custom_call.1} parent=5 // pred_region
        %s111 = ssub.s32 %s7, 1
        %p112 = scmp.lt.s32.totalorder %s16, 1
        %s113 = scalar_select %p112, %s16, 1
        %p114 = scmp.lt.s32.totalorder %s17, 1
        %s115 = scalar_select %p114, %s17, 1
        %s116 = smul.addr %s113, 2
        %s117 = sadd.s32 %s115, %s116
        %s118 = smul.addr %s117, 8
        %s119 = scalar_lea.vmem %s0, %s118
        %p120 = pneg %p47
        %p121 = pneg %p44
        %p122 = pneg %p75
        %p123 = pneg %p72
        %s124 = sand.u32 %s62, 1
        %s125 = sand.u32 %s62, 1
        %s126 = smul.addr %s125, 16
        %s127 = scalar_lea.vmem [#allocation2], %s126
        %p128 = scmp.lt.s32.totalorder %s16, 1
        %s129 = scalar_select %p128, %s16, 1
        %p130 = scmp.lt.s32.totalorder %s17, 1
        %s131 = scalar_select %p130, %s17, 1
        %s132 = smul.addr %s129, 2
        %s133 = sadd.s32 %s131, %s132
        %s134 = smul.addr %s133, 8
        %s135 = scalar_lea.vmem %s0, %s134
        %v136 = vld [vmem:[%s135] sm:$0xff]
        %vm137 = vcmask 31744
        %138 = vst.msk [vmem:[%s127] sm:$0xff] %vm137, %v136
        %v139 = vld [vmem:[%s135] sm:$0xff]
        %141 = vrot.lane.b32.xlu0 %v139, 124
        %v142 = vpop.permute.xlu0 %141
        %s144 = scalar_lea.vmem %s127, 8 [#allocation2]
        %145 = vst.msk [vmem:[%s144] sm:$0xff] %vm137, %v142
        %s146 = sand.u32 %s62, 1
        %s147 = sand.u32 %s62, 1
        %s148 = smul.addr %s147, 16
        %s149 = scalar_lea.vmem [#allocation2], %s148
        // Predicated region
        $region25: #{tpu_custom_call.1} parent=23 // pred_check
          %p150 = pneg %p72
        $region26: #{tpu_custom_call.1} parent=23 // pred_check_branch
          %152 = sbr.rel (%p150) target = $region28
        $region27: #{tpu_custom_call.1} parent=23 // pred_region
          %s153 = smul.addr %s16, 4
          %s154 = sadd.s32 %s17, %s153
          %s155 = smul.addr %s154, 8
          %s156 = scalar_lea.vmem %s1, %s155
          // Predicated region
          $region29: #{tpu_custom_call.1} parent=27 // pred_check
            _
          $region30: #{tpu_custom_call.1} parent=27 // pred_check_branch
            %158 = sbr.rel (0) target = $region32
          $region31: #{tpu_custom_call.1} parent=27 // pred_region
            // Predicated region
            $region33: #{tpu_custom_call.1} parent=31 // pred_check
              _
            $region34: #{tpu_custom_call.1} parent=31 // pred_check_branch
              %160 = sbr.rel (0) target = $region36
            $region35: #{tpu_custom_call.1} parent=31 // pred_region
              // Predicated region
              $region48: #{tpu_custom_call.1} parent=35 // pred_check
                _
              $region49: #{tpu_custom_call.1} parent=35 // pred_check_branch
                %178 = sbr.rel (0) target = $region51
              $region50: #{tpu_custom_call.1} parent=35 // pred_region
                loop: start=0, step=1, limit=1
                $region52: #{tpu_custom_call.1} parent=50 // loop_pre_header
                  _
                $region53: #{tpu_custom_call.1} parent=50 // loop_header
                  %s180 = sphi 0, %s184
                  %p181 = scmp.ge.s32.totalorder %s180, 1
                  %s185 = sphi %s149, %s149
                  %s186 = sphi %s156, %s156
                $region54: #{tpu_custom_call.1} parent=50 // loop_header_branch
                  %183 = sbr.rel (%p181) target = $region58
                $region55: #{tpu_custom_call.1} parent=50 // loop_body
                  %v187 = vld [vmem:[%s185] sm:$0xff]
                  %188 = vst [vmem:[%s186] sm:$0xff] %v187
                  %v189 = vld [vmem:[%s185 + $0x8] sm:$0xff]
                  %190 = vst [vmem:[%s186 + $0x10] sm:$0xff] %v189
                $region56: #{tpu_custom_call.1} parent=50 // loop_footer
                  %s184 = sadd.s32 1, %s180
                $region57: #{tpu_custom_call.1} parent=50 // loop_footer_branch
                  %179 = sbr.rel target = $region53
                $region58: #{tpu_custom_call.1} parent=50 // loop_exit
                  _
              $region51: #{tpu_custom_call.1} parent=35 // pred_fallthru
                _
              // Predicated region
              $region59: #{tpu_custom_call.1} parent=35 // pred_check
                _
              $region60: #{tpu_custom_call.1} parent=35 // pred_check_branch
                %192 = sbr.rel target = $region62
              $region61: #{tpu_custom_call.1} parent=35 // pred_region
                _
              $region62: #{tpu_custom_call.1} parent=35 // pred_fallthru
                _
            $region36: #{tpu_custom_call.1} parent=31 // pred_fallthru
              _
            // Predicated region
            $region37: #{tpu_custom_call.1} parent=31 // pred_check
              _
            $region38: #{tpu_custom_call.1} parent=31 // pred_check_branch
              %162 = sbr.rel target = $region40
            $region39: #{tpu_custom_call.1} parent=31 // pred_region
              %s164 = ssub.s32 256, 1
              loop: start=0, step=1, limit=1
              $region41: #{tpu_custom_call.1} parent=39 // loop_pre_header
                _
              $region42: #{tpu_custom_call.1} parent=39 // loop_header
                %s166 = sphi 0, %s170
                %p167 = scmp.ge.s32.totalorder %s166, 1
                %s171 = sphi %s149, %s149
                %s172 = sphi %s156, %s156
              $region43: #{tpu_custom_call.1} parent=39 // loop_header_branch
                %169 = sbr.rel (%p167) target = $region47
              $region44: #{tpu_custom_call.1} parent=39 // loop_body
                %v173 = vld [vmem:[%s171] sm:%s164]
                %174 = vst [vmem:[%s172] sm:%s164] %v173
                %v175 = vld [vmem:[%s171 + $0x8] sm:%s164]
                %176 = vst [vmem:[%s172 + $0x10] sm:%s164] %v175
              $region45: #{tpu_custom_call.1} parent=39 // loop_footer
                %s170 = sadd.s32 1, %s166
              $region46: #{tpu_custom_call.1} parent=39 // loop_footer_branch
                %165 = sbr.rel target = $region42
              $region47: #{tpu_custom_call.1} parent=39 // loop_exit
                _
            $region40: #{tpu_custom_call.1} parent=31 // pred_fallthru
              _
          $region32: #{tpu_custom_call.1} parent=27 // pred_fallthru
            _
          %193 = vnop
        $region28: #{tpu_custom_call.1} parent=23 // pred_fallthru
          _
      $region24: #{tpu_custom_call.1} parent=5 // pred_fallthru
        _
      %p194 = scmp.le.s32.totalorder 2, %s7
      // Predicated region
      $region63: #{tpu_custom_call.1} parent=5 // pred_check
        %p195 = pneg %p194
      $region64: #{tpu_custom_call.1} parent=5 // pred_check_branch
        %197 = sbr.rel (%p195) target = $region66
      $region65: #{tpu_custom_call.1} parent=5 // pred_region
        %s198 = ssub.s32 %s7, 2
        // Predicated region
        $region67: #{tpu_custom_call.1} parent=65 // pred_check
          %p199 = pneg %p78
        $region68: #{tpu_custom_call.1} parent=65 // pred_check_branch
          %201 = sbr.rel (%p199) target = $region70
        $region69: #{tpu_custom_call.1} parent=65 // pred_region
          %s202 = sand.u32 %s63, 1
          %s203 = sand.u32 %s63, 1
          %s204 = smul.addr %s203, 16
          %s205 = scalar_lea.vmem [#allocation2], %s204
        $region70: #{tpu_custom_call.1} parent=65 // pred_fallthru
          _
      $region66: #{tpu_custom_call.1} parent=5 // pred_fallthru
        _
    $region6: #{tpu_custom_call.1} parent=1 // loop_footer
      %s11 = sadd.s32 1, %s7
    $region7: #{tpu_custom_call.1} parent=1 // loop_footer_branch
      %6 = sbr.rel target = $region3
    $region8: #{tpu_custom_call.1} parent=1 // loop_exit
      _

</llo_original>
